<compile_context>
chip_gen: v7x
topology: tpu7x:2x2x1
jax: 0.10.0
libtpu: 0.0.40
codegen_flags: <defaults>
</compile_context>

<pallas_src>
import math
import functools

import jax
import jax.numpy as jnp
from jax.experimental import pallas as pl
from jax.experimental.pallas import tpu as pltpu


# ---------------------------------------------------------------------------
# Kernels (operate on lane-dense [tS, B*D] tiles)
# ---------------------------------------------------------------------------
def pe_add_kernel(x_ref, pe_ref, o_ref):
    o_ref[...] = (x_ref[...] + pe_ref[...]).astype(o_ref.dtype)


def pe_add_dropout_kernel(x_ref, pe_ref, rand_ref, o_ref, *, p):
    # Inverted dropout with keep-prob (1 - p).  `rand_ref` holds uniform [0,1)
    # values generated outside the kernel (portable; distinct per tile because
    # it is sliced by the same BlockSpec as x).
    y = x_ref[...] + pe_ref[...]
    keep = rand_ref[...] >= p
    scale = 1.0 / (1.0 - p)          # Python-time constant
    o_ref[...] = jnp.where(keep, y * scale, jnp.zeros_like(y)).astype(o_ref.dtype)


# ---------------------------------------------------------------------------
# Helpers
# ---------------------------------------------------------------------------
def make_pe_table(max_len, d_model, dtype=jnp.float32):
    """Deterministic sinusoidal table, same math as the PyTorch __init__."""
    position = jnp.arange(max_len, dtype=jnp.float32)[:, None]            # [L, 1]
    div_term = jnp.exp(
        jnp.arange(0, d_model, 2, dtype=jnp.float32)
        * (-math.log(10000.0) / d_model)
    )                                                                      # [D/2]
    pe = jnp.zeros((max_len, d_model), dtype=jnp.float32)
    pe = pe.at[:, 0::2].set(jnp.sin(position * div_term))
    pe = pe.at[:, 1::2].set(jnp.cos(position * div_term))
    return pe.astype(dtype)                                                # [L, D]


def _choose_tile_s(S, BD, itemsize, target_bytes=1 << 20):
    """Pick a sequence-tile height: multiple of 8, ~1 MiB per tile, <= S."""
    rows = max(8, target_bytes // max(1, BD * itemsize))
    rows = max(8, (rows // 8) * 8)
    if rows >= S:
        return S
    return int(rows)


# ---------------------------------------------------------------------------
# Wrapper
# ---------------------------------------------------------------------------
def positional_encoding_forward(x, pe_table, *, p=0.1, training=False, rng_key=None):
    """x: [S, B, D]. Returns x + pe[:S] (with inverted dropout if training)."""
    S, B, D = x.shape
    BD = B * D
    x_flat = x.reshape(S, BD)                                   # lane-dense
    pe_flat = jnp.tile(pe_table[:S, :], (1, B)).astype(x.dtype)  # [S, B*D]

    tS = _choose_tile_s(S, BD, jnp.dtype(x.dtype).itemsize)
    grid = (pl.cdiv(S, tS),)
    tile_spec = pl.BlockSpec((tS, BD), lambda i: (i, 0))

    cparams = pltpu.CompilerParams(
        dimension_semantics=("parallel",),      # v7x: 2 TCs split the grid
        vmem_limit_bytes=32 * 1024 * 1024,      # headroom, safe on 64 MiB v7x
    )

    apply_dropout = training and p > 0.0
    if apply_dropout and p >= 1.0:
        return jnp.zeros_like(x)

    if not apply_dropout:
        out_flat = pl.pallas_call(
            pe_add_kernel,
            out_shape=jax.ShapeDtypeStruct((S, BD), x.dtype),
            grid=grid,
            in_specs=[tile_spec, tile_spec],
            out_specs=tile_spec,
            input_output_aliases={0: 0},
            compiler_params=cparams,
        )(x_flat, pe_flat)
        return out_flat.reshape(S, B, D)

    if rng_key is None:
        rng_key = jax.random.PRNGKey(0)
    # TODO(synk): nn.Dropout's stateful RNG has no direct Pallas equivalent
    # portable to interpret mode; the mask randomness is generated here with
    # jax.random and streamed through the kernel tile-by-tile instead.
    rand = jax.random.uniform(rng_key, (S, BD), dtype=jnp.float32)

    out_flat = pl.pallas_call(
        functools.partial(pe_add_dropout_kernel, p=float(p)),
        out_shape=jax.ShapeDtypeStruct((S, BD), x.dtype),
        grid=grid,
        in_specs=[tile_spec, tile_spec, tile_spec],
        out_specs=tile_spec,
        input_output_aliases={0: 0},
        compiler_params=cparams,
    )(x_flat, pe_flat, rand)
    return out_flat.reshape(S, B, D)


# ---------------------------------------------------------------------------
# Main
# ---------------------------------------------------------------------------
if __name__ == "__main__":
    SEQ, BATCH, D_MODEL = 8, 2, 32
    MAX_LEN = 64          # small stand-in for max_len=5000
    DROPOUT_P = 0.1

    key = jax.random.PRNGKey(0)
    x = jax.random.normal(key, (SEQ, BATCH, D_MODEL), dtype=jnp.float32)
    pe_table = make_pe_table(MAX_LEN, D_MODEL)

    # References computed up front (before any aliased kernel call).
    ref_eval = x + pe_table[:SEQ, :][:, None, :]
    drop_key = jax.random.PRNGKey(42)
    rand_ref = jax.random.uniform(
        drop_key, (SEQ, BATCH * D_MODEL), dtype=jnp.float32
    ).reshape(SEQ, BATCH, D_MODEL)
    keep_ref = rand_ref >= DROPOUT_P
    ref_train = jnp.where(keep_ref, ref_eval / (1.0 - DROPOUT_P), 0.0)

    # Eval mode (dropout = identity).
    out_eval = positional_encoding_forward(x, pe_table, p=DROPOUT_P, training=False)
    out_eval = jax.block_until_ready(out_eval)
    assert out_eval.shape == (SEQ, BATCH, D_MODEL)
    assert jnp.allclose(out_eval, ref_eval, atol=1e-6), "eval-mode mismatch"

    # Training mode (inverted dropout, mask passed through the kernel).
    out_train = positional_encoding_forward(
        x, pe_table, p=DROPOUT_P, training=True, rng_key=drop_key
    )
    out_train = jax.block_until_ready(out_train)
    assert out_train.shape == (SEQ, BATCH, D_MODEL)
    assert jnp.allclose(out_train, ref_train, atol=1e-5), "train-mode mismatch"

    print("KERNEL_OK")
</pallas_src>

<mosaic_0001>
module attributes {stable_mosaic.version = 11 : i64} {
  func.func @pe_add_kernel(%arg0: i32, %arg1: memref<8x64xf32, #tpu.memory_space<vmem>>, %arg2: memref<8x64xf32, #tpu.memory_space<vmem>>, %arg3: memref<8x64xf32, #tpu.memory_space<vmem>>) attributes {dimension_semantics = [#tpu.dimension_semantics<parallel>], iteration_bounds = array<i64: 1>, scalar_prefetch = 0 : i64, scratch_operands = 0 : i64, tpu.core_type = #tpu.core_type<tc>, window_params = [{transform_indices = @transform_0, window_bounds = array<i64: 8, 64>}, {transform_indices = @transform_1, window_bounds = array<i64: 8, 64>}, {transform_indices = @transform_2, window_bounds = array<i64: 8, 64>}]} {
    %c0 = arith.constant 0 : index
    %c0_0 = arith.constant 0 : index
    %0 = vector.load %arg1[%c0, %c0_0] : memref<8x64xf32, #tpu.memory_space<vmem>>, vector<8x64xf32>
    %c0_1 = arith.constant 0 : index
    %c0_2 = arith.constant 0 : index
    %1 = vector.load %arg2[%c0_1, %c0_2] : memref<8x64xf32, #tpu.memory_space<vmem>>, vector<8x64xf32>
    %2 = arith.addf %0, %1 : vector<8x64xf32>
    %c0_3 = arith.constant 0 : index
    %c0_4 = arith.constant 0 : index
    %3 = vector.load %arg3[%c0_3, %c0_4] : memref<8x64xf32, #tpu.memory_space<vmem>>, vector<8x64xf32>
    tpu.vector_store %arg3[%c0_3, %c0_4], %2 {strides = array<i32>} : memref<8x64xf32, #tpu.memory_space<vmem>>, vector<8x64xf32>,
    return
  }
  func.func @transform_0(%arg0: i32) -> (i32, i32) {
    %c0_i32 = arith.constant 0 : i32
    %c0_i32_0 = arith.constant 0 : i32
    return %arg0, %c0_i32 : i32, i32
  }
  func.func @transform_1(%arg0: i32) -> (i32, i32) {
    %c0_i32 = arith.constant 0 : i32
    %c0_i32_0 = arith.constant 0 : i32
    return %arg0, %c0_i32 : i32, i32
  }
  func.func @transform_2(%arg0: i32) -> (i32, i32) {
    %c0_i32 = arith.constant 0 : i32
    %c0_i32_0 = arith.constant 0 : i32
    return %arg0, %c0_i32 : i32, i32
  }
}

</mosaic_0001>

<llo_original>
// kernel: tpu_custom_call.1
$region0: #{tpu_custom_call.1}
  #allocation0 [shape = 'u32[]', space=smem, size = 0x4, offset = 0x4, fixed_abs, tag = 'smem constant byte address 0x4 - core index']
  #allocation1 [shape = 'u32[144,128]{1,0:T(1,128)}', space=vmem, size = 0x12000, scoped, tag = 'internal scratch']
  %s0 = inlined_call_operand.hbm [shape: f32[8,64], index: 0, kind: input, shape index: {}, may-alias: {0,2}]
  %s1 = inlined_call_operand.vmem [shape: f32[8,64], index: 1, kind: input, shape index: {}]
  %s2 = inlined_call_operand.hbm [shape: f32[8,64], index: 2, kind: output, shape index: {}, may-alias: {0,2}]
  %s3 = sld [smem:[#allocation0]]
  $region22: #{tpu_custom_call.1} parent=0
    _
  %s5 = ssub.s32 1, %s3
  %s6 = scalar_select 0, %s5, %s3
  $region1: #{tpu_custom_call.1} parent=0
    #allocation2 [shape = 'u8[4096]{0}', space=vmem, size = 0x1000, scoped, tag = 'input window, operand 0, single buffered']
    #allocation3 [shape = 's32[1]{0}', space=sflag, size = 0x4, scoped, tag = 'scoped memory for tpu_custom_call.1']
    #allocation4 [shape = 's32[1]{0}', space=sflag, size = 0x4, scoped, tag = 'scoped memory for tpu_custom_call.1']
    #allocation5 [shape = 'u8[4096]{0}', space=vmem, size = 0x1000, scoped, tag = 'output window, operand 0, single buffered']
    %7 = vsyncpa [#allocation3], 0
    %8 = vsyncpa [#allocation4], 0
    // Predicated region
    $region2: #{tpu_custom_call.1} parent=1 // pred_check
      _
    $region3: #{tpu_custom_call.1} parent=1 // pred_check_branch
      %10 = sbr.rel (0) target = $region5
    $region4: #{tpu_custom_call.1} parent=1 // pred_region
      %s12 = ssub.s32 128, 128
      %13 = vsyncadd [#allocation3], %s12
      %s15 = sshll.u32 [#allocation2], 4
      %s16 = int_to_ptr.vmem [resolvable:$true] %s15
      %18 = dma.hbm_to_vmem [thread:$0]  %s0, 128, %s16, [#allocation3]
    $region5: #{tpu_custom_call.1} parent=1 // pred_fallthru
      _
    // Predicated region
    $region6: #{tpu_custom_call.1} parent=1 // pred_check
      _
    $region7: #{tpu_custom_call.1} parent=1 // pred_check_branch
      %20 = sbr.rel (0) target = $region9
    $region8: #{tpu_custom_call.1} parent=1 // pred_region
      _
    $region9: #{tpu_custom_call.1} parent=1 // pred_fallthru
      _
    // Predicated region
    $region10: #{tpu_custom_call.1} parent=1 // pred_check
      _
    $region11: #{tpu_custom_call.1} parent=1 // pred_check_branch
      %22 = sbr.rel (0) target = $region13
    $region12: #{tpu_custom_call.1} parent=1 // pred_region
      %23 = dma.done [#allocation3], 128
    $region13: #{tpu_custom_call.1} parent=1 // pred_fallthru
      _
    %v24 = vld [vmem:[#allocation2] sm:$0xff]
    %v25 = vld [vmem:[%s1] sm:$0xff]
    %v26 = vadd.f32 %v24, %v25
    %vm27 = vcmask 523264
    %28 = vst.msk [vmem:[#allocation5] sm:$0xff] %vm27, %v26
    // Predicated region
    $region14: #{tpu_custom_call.1} parent=1 // pred_check
      _
    $region15: #{tpu_custom_call.1} parent=1 // pred_check_branch
      %30 = sbr.rel (0) target = $region17
    $region16: #{tpu_custom_call.1} parent=1 // pred_region
      %s32 = ssub.s32 128, 128
      %33 = vsyncadd [#allocation4], %s32
      %s35 = sshll.u32 [#allocation5], 4
      %s36 = int_to_ptr.vmem [resolvable:$true] %s35
      %38 = dma.vmem_to_hbm [thread:$0]  %s36, 128, %s2, [#allocation4]
    $region17: #{tpu_custom_call.1} parent=1 // pred_fallthru
      _
    // Predicated region
    $region18: #{tpu_custom_call.1} parent=1 // pred_check
      _
    $region19: #{tpu_custom_call.1} parent=1 // pred_check_branch
      %40 = sbr.rel (0) target = $region21
    $region20: #{tpu_custom_call.1} parent=1 // pred_region
      %41 = dma.done [#allocation4], 128
    $region21: #{tpu_custom_call.1} parent=1 // pred_fallthru
      _
    %42 = vsyncpa [#allocation3], 1
    %43 = vsyncpa [#allocation4], 1

</llo_original>
